<compile_context>
chip_gen: v7x
topology: tpu7x:2x2x1
jax: 0.10.0
libtpu: 0.0.40
codegen_flags: <defaults>
</compile_context>

<pallas_src>
import jax
import jax.numpy as jnp
from jax.experimental import pallas as pl
from jax.experimental.pallas import tpu as pltpu

HIDDEN = 10  # fc1 out_features == fc2 in_features (fixed by the module spec)


def mlp_kernel(x_ref, p_ref, o_ref):
    x = x_ref[...]            # (1, TILE_B)    batch on lanes
    p = p_ref[...]            # (HIDDEN, 4)    packed params
    w1 = p[:, 0:1]            # (HIDDEN, 1)    fc1 weight (column)
    b1 = p[:, 1:2]            # (HIDDEN, 1)    fc1 bias
    w2 = p[:, 2:3]            # (HIDDEN, 1)    fc2 weight (column)
    b2 = p[0:1, 3:4]          # (1, 1)         fc2 bias

    # fc1 (K=1) + ReLU: pure VPU broadcast multiply-add -> (HIDDEN, TILE_B)
    h = jnp.maximum(w1 * x + b1, 0.0)
    # fc2 (N=1): elementwise mul + cross-sublane (XLU) reduce -> (1, TILE_B)
    y = jnp.sum(h * w2, axis=0, keepdims=True) + b2
    # sigmoid: exp on the EUP; exact division keeps 1e-5 agreement with torch.
    o_ref[...] = (1.0 / (1.0 + jnp.exp(-y))).astype(o_ref.dtype)


def simple_nn_forward(x, w1, b1, w2, b2, *, tile_b=512):
    """x: (B, 1) f32. Params in PyTorch layout:
    w1 (10,1), b1 (10,), w2 (1,10), b2 (1,). Returns (B, 1) f32."""
    B = x.shape[0]
    H = w1.shape[0]

    # Pack every parameter into one (H, 4) slab: [w1 | b1 | w2 | b2(bcast)].
    params = jnp.stack(
        [w1[:, 0], b1, w2[0, :], jnp.full((H,), b2[0], dtype=jnp.float32)],
        axis=1,
    ).astype(jnp.float32)

    # Lane-dense layout: batch on the lane axis, padded to a multiple of the tile.
    tile = min(tile_b, pl.cdiv(B, 128) * 128)
    Bp = pl.cdiv(B, tile) * tile
    x_lanes = jnp.zeros((1, Bp), jnp.float32).at[0, :B].set(x[:, 0])

    out = pl.pallas_call(
        mlp_kernel,
        out_shape=jax.ShapeDtypeStruct((1, Bp), jnp.float32),
        grid=(Bp // tile,),
        in_specs=[
            pl.BlockSpec((1, tile), lambda i: (0, i)),   # x tile, batch on lanes
            pl.BlockSpec((H, 4), lambda i: (0, 0)),      # packed params, resident
        ],
        out_specs=pl.BlockSpec((1, tile), lambda i: (0, i)),
        compiler_params=pltpu.CompilerParams(
            dimension_semantics=("parallel",),           # shard batch over TCs on v7x
        ),
    )(x_lanes, params)
    return out[0, :B].reshape(B, 1)


def init_params(key):
    # Mimic PyTorch nn.Linear defaults: U(-1/sqrt(fan_in), 1/sqrt(fan_in)).
    k1, k2, k3, k4 = jax.random.split(key, 4)
    bound1 = 1.0                      # fc1: fan_in = 1
    bound2 = 1.0 / jnp.sqrt(10.0)     # fc2: fan_in = 10
    w1 = jax.random.uniform(k1, (HIDDEN, 1), jnp.float32, -bound1, bound1)
    b1 = jax.random.uniform(k2, (HIDDEN,), jnp.float32, -bound1, bound1)
    w2 = jax.random.uniform(k3, (1, HIDDEN), jnp.float32, -bound2, bound2)
    b2 = jax.random.uniform(k4, (1,), jnp.float32, -bound2, bound2)
    return w1, b1, w2, b2


if __name__ == "__main__":
    key = jax.random.PRNGKey(0)
    k_x, k_p = jax.random.split(key)

    B = 8  # small batch; padded to one 128-lane tile inside the wrapper
    x = jax.random.normal(k_x, (B, 1), jnp.float32)
    w1, b1, w2, b2 = init_params(k_p)

    fwd = jax.jit(simple_nn_forward)
    out = jax.block_until_ready(fwd(x, w1, b1, w2, b2))

    # Reference in plain JAX with PyTorch-layout params (same math as the module).
    ref = jax.nn.sigmoid(jnp.maximum(x @ w1.T + b1, 0.0) @ w2.T + b2)
    assert out.shape == (B, 1)
    assert jnp.allclose(out, ref, atol=1e-5, rtol=1e-5), float(
        jnp.max(jnp.abs(out - ref))
    )

    print("KERNEL_OK")
</pallas_src>

<mosaic_0001>
module attributes {stable_mosaic.version = 11 : i64} {
  func.func @mlp_kernel(%arg0: i32, %arg1: memref<1x128xf32, #tpu.memory_space<vmem>>, %arg2: memref<10x4xf32, #tpu.memory_space<vmem>>, %arg3: memref<1x128xf32, #tpu.memory_space<vmem>>) attributes {dimension_semantics = [#tpu.dimension_semantics<parallel>], iteration_bounds = array<i64: 1>, scalar_prefetch = 0 : i64, scratch_operands = 0 : i64, tpu.core_type = #tpu.core_type<tc>, window_params = [{transform_indices = @transform_0, window_bounds = array<i64: 1, 128>}, {pipeline_mode = #tpu.pipeline_mode<synchronous>, transform_indices = @transform_1, window_bounds = array<i64: 10, 4>}, {transform_indices = @transform_2, window_bounds = array<i64: 1, 128>}]} {
    %c0 = arith.constant 0 : index
    %c0_0 = arith.constant 0 : index
    %0 = vector.load %arg1[%c0, %c0_0] : memref<1x128xf32, #tpu.memory_space<vmem>>, vector<1x128xf32>
    %c0_1 = arith.constant 0 : index
    %c0_2 = arith.constant 0 : index
    %1 = vector.load %arg2[%c0_1, %c0_2] : memref<10x4xf32, #tpu.memory_space<vmem>>, vector<10x4xf32>
    %2 = vector.extract_strided_slice %1 {offsets = [0, 0], sizes = [10, 1], strides = [1, 1]} : vector<10x4xf32> to vector<10x1xf32>
    %3 = vector.extract_strided_slice %1 {offsets = [0, 1], sizes = [10, 1], strides = [1, 1]} : vector<10x4xf32> to vector<10x1xf32>
    %4 = vector.extract_strided_slice %1 {offsets = [0, 2], sizes = [10, 1], strides = [1, 1]} : vector<10x4xf32> to vector<10x1xf32>
    %5 = vector.extract_strided_slice %1 {offsets = [0, 3], sizes = [1, 1], strides = [1, 1]} : vector<10x4xf32> to vector<1x1xf32>
    %6 = vector.broadcast %2 : vector<10x1xf32> to vector<10x128xf32>
    %7 = vector.broadcast %0 : vector<1x128xf32> to vector<10x128xf32>
    %8 = arith.mulf %6, %7 : vector<10x128xf32>
    %9 = vector.broadcast %3 : vector<10x1xf32> to vector<10x128xf32>
    %10 = arith.addf %8, %9 : vector<10x128xf32>
    %cst = arith.constant 0.000000e+00 : f32
    %11 = vector.broadcast %cst : f32 to vector<10x128xf32>
    %12 = arith.maximumf %10, %11 : vector<10x128xf32>
    %13 = vector.broadcast %4 : vector<10x1xf32> to vector<10x128xf32>
    %14 = arith.mulf %12, %13 : vector<10x128xf32>
    %cst_3 = arith.constant dense<0.000000e+00> : vector<128xf32>
    %15 = vector.multi_reduction <add>, %14, %cst_3 [0] : vector<10x128xf32> to vector<128xf32>
    %16 = vector.shape_cast %15 : vector<128xf32> to vector<1x128xf32>
    %17 = vector.broadcast %5 : vector<1x1xf32> to vector<1x128xf32>
    %18 = arith.addf %16, %17 : vector<1x128xf32>
    %cst_4 = arith.constant 0.000000e+00 : f32
    %19 = vector.broadcast %cst_4 : f32 to vector<1x128xf32>
    %20 = arith.subf %19, %18 : vector<1x128xf32>
    %21 = math.exp %20 : vector<1x128xf32>
    %cst_5 = arith.constant 1.000000e+00 : f32
    %22 = vector.broadcast %cst_5 : f32 to vector<1x128xf32>
    %23 = arith.addf %22, %21 : vector<1x128xf32>
    %cst_6 = arith.constant 1.000000e+00 : f32
    %24 = vector.broadcast %cst_6 : f32 to vector<1x128xf32>
    %25 = arith.divf %24, %23 : vector<1x128xf32>
    %c0_7 = arith.constant 0 : index
    %c0_8 = arith.constant 0 : index
    %26 = vector.load %arg3[%c0_7, %c0_8] : memref<1x128xf32, #tpu.memory_space<vmem>>, vector<1x128xf32>
    tpu.vector_store %arg3[%c0_7, %c0_8], %25 {strides = array<i32>} : memref<1x128xf32, #tpu.memory_space<vmem>>, vector<1x128xf32>,
    return
  }
  func.func @transform_0(%arg0: i32) -> (i32, i32) {
    %c0_i32 = arith.constant 0 : i32
    %c0_i32_0 = arith.constant 0 : i32
    return %c0_i32, %arg0 : i32, i32
  }
  func.func @transform_1(%arg0: i32) -> (i32, i32) {
    %c0_i32 = arith.constant 0 : i32
    %c0_i32_0 = arith.constant 0 : i32
    %c0_i32_1 = arith.constant 0 : i32
    return %c0_i32, %c0_i32_0 : i32, i32
  }
  func.func @transform_2(%arg0: i32) -> (i32, i32) {
    %c0_i32 = arith.constant 0 : i32
    %c0_i32_0 = arith.constant 0 : i32
    return %c0_i32, %arg0 : i32, i32
  }
}

</mosaic_0001>

<llo_original>
// kernel: simple_nn_forward.1
$region0: #{simple_nn_forward.1}
  #allocation0 [shape = 'u32[]', space=smem, size = 0x4, offset = 0x4, fixed_abs, tag = 'smem constant byte address 0x4 - core index']
  #allocation1 [shape = 'u32[144,128]{1,0:T(1,128)}', space=vmem, size = 0x12000, scoped, tag = 'internal scratch']
  %s0 = inlined_call_operand.vmem [shape: f32[1,128], index: 0, kind: input, shape index: {}]
  %s1 = inlined_call_operand.vmem [shape: f32[10,4], index: 1, kind: input, shape index: {}]
  %s2 = inlined_call_operand.vmem [shape: f32[1,128], index: 2, kind: output, shape index: {}]
  %s3 = sld [smem:[#allocation0]]
  $region18: #{simple_nn_forward.1} parent=0
    _
  %s5 = ssub.s32 1, %s3
  %s6 = scalar_select 0, %s5, %s3
  // Predicated region
  $region2: #{simple_nn_forward.1} parent=0 // pred_check
    _
  $region3: #{simple_nn_forward.1} parent=0 // pred_check_branch
    %8 = sbr.rel (0) target = $region5
  $region4: #{simple_nn_forward.1} parent=0 // pred_region
    _
  $region5: #{simple_nn_forward.1} parent=0 // pred_fallthru
    _
  // Predicated region
  $region6: #{simple_nn_forward.1} parent=0 // pred_check
    _
  $region7: #{simple_nn_forward.1} parent=0 // pred_check_branch
    %10 = sbr.rel (0) target = $region9
  $region8: #{simple_nn_forward.1} parent=0 // pred_region
    _
  $region9: #{simple_nn_forward.1} parent=0 // pred_fallthru
    _
  %v11 = vld [vmem:[%s0] sm:$0x1]
  %v12 = vld [vmem:[%s1] sm:$0xff]
  %v13 = vld [vmem:[%s1 + $0x8] sm:$0x3]
  %15 = vset.pattern.permute.xlu0 0
  %16 = vperm.xlu0 %15, %v12
  %v17 = vpop.permute.xlu0 %16
  %20 = vset.pattern.permute.xlu0 0
  %21 = vperm.xlu0 %20, %v13
  %v22 = vpop.permute.xlu0 %21
  %v25 = vlaneseq
  %v26 = vshrl.u32 %v25, 7
  %v27 = vsub.s32 0, %v26
  %v28 = vrot.slane %v11, %v27
  %v30 = vmul.f32 %v17, %v28
  %v31 = vmul.f32 %v22, %v28
  %32 = vset.pattern.permute.xlu0 1
  %33 = vperm.xlu0 %32, %v12
  %v34 = vpop.permute.xlu0 %33
  %36 = vset.pattern.permute.xlu0 1
  %37 = vperm.xlu0 %36, %v13
  %v38 = vpop.permute.xlu0 %37
  %v40 = vadd.f32 %v30, %v34
  %v41 = vadd.f32 %v31, %v38
  %v42 = vmax.f32 %v40, 0.0
  %v43 = vmax.f32 %v41, 0.0
  %44 = vset.pattern.permute.xlu0 2
  %45 = vperm.xlu0 %44, %v12
  %v46 = vpop.permute.xlu0 %45
  %48 = vset.pattern.permute.xlu0 2
  %49 = vperm.xlu0 %48, %v13
  %v50 = vpop.permute.xlu0 %49
  %v52 = vmul.f32 %v42, %v46
  %v53 = vmul.f32 %v43, %v50
  %vm54 = vcmask 1041408
  %v55 = vsel %vm54, %v53, 0.0
  %v56 = vadd.f32 %v52, %v55
  %v57 = vrot.slane %v56, 4
  %v58 = vadd.f32 %v56, %v57
  %v59 = vrot.slane %v58, 2
  %v60 = vadd.f32 %v58, %v59
  %v61 = vrot.slane %v60, 1
  %v62 = vadd.f32 %v60, %v61
  %63 = vset.pattern.permute.xlu0 3
  %64 = vperm.xlu0 %63, %v12
  %v65 = vpop.permute.xlu0 %64
  %v67 = vadd.f32 %v62, %v65
  %v68 = vsub.f32 0.0, %v67
  %v69 = vmul.f32 %v68, 1.442695
  %v70 = vpow.pop %v69
  %v71 = vadd.f32 %v70, 1.0
  %v72 = vrcp.pop %v71
  %v73 = vmul.f32 1.0, %v72
  %74 = vst [vmem:[%s2] sm:$0x1] %v73
  // Predicated region
  $region10: #{simple_nn_forward.1} parent=0 // pred_check
    _
  $region11: #{simple_nn_forward.1} parent=0 // pred_check_branch
    %76 = sbr.rel (0) target = $region13
  $region12: #{simple_nn_forward.1} parent=0 // pred_region
    _
  $region13: #{simple_nn_forward.1} parent=0 // pred_fallthru
    _
  // Predicated region
  $region14: #{simple_nn_forward.1} parent=0 // pred_check
    _
  $region15: #{simple_nn_forward.1} parent=0 // pred_check_branch
    %78 = sbr.rel (0) target = $region17
  $region16: #{simple_nn_forward.1} parent=0 // pred_region
    _
  $region17: #{simple_nn_forward.1} parent=0 // pred_fallthru
    _

</llo_original>
